<compile_context>
chip_gen: v6e
topology: v6e:2x2x1
jax: 0.10.0
libtpu: 0.0.40
codegen_flags: <defaults>
</compile_context>

<pallas_src>
import functools

import jax
import jax.numpy as jnp
from jax.experimental import pallas as pl
from jax.experimental.pallas import tpu as pltpu


def _mixprop_kernel(x_ref, adj_ref, w_ref, b_ref, o_ref, *, gdep, alpha,
                    matmul_dtype):
    """One block = t_rows timesteps x g packed (b,t) groups.

    x_ref   : (1, R, L)   R = t_rows*c_in rows (t major, c minor),
                          L = lanes (group major, node minor), zero-padded
    adj_ref : (L, L)      resident: (1-alpha) * kron(I_g, adj.T), zero-padded
    w_ref   : (gdep+1, Ro, R)  resident: kron(I_t_rows, W_k), Ro = t_rows*c_out
    b_ref   : (Ro, 1)     resident bias (tiled per timestep row-group)
    o_ref   : (1, Ro, L)
    """
    x = x_ref[0].astype(jnp.float32)                 # (R, L)
    adj = adj_ref[...]                               # (L, L)  bf16, pre-scaled
    ax = alpha * x                                   # hoisted out of hop loop

    h = x
    h_mm = x.astype(matmul_dtype)
    # hop-0 MLP contribution (one MXU matmul, f32 accumulation)
    acc = jnp.dot(w_ref[0], h_mm, preferred_element_type=jnp.float32)
    for k in range(1, gdep + 1):                     # static, small unroll
        # graph propagation: one MXU matmul per hop over the whole block
        h = ax + jnp.dot(h_mm, adj, preferred_element_type=jnp.float32)
        h_mm = h.astype(matmul_dtype)
        # fold hop-k MLP contribution immediately (no hops kept live)
        acc = acc + jnp.dot(w_ref[k], h_mm, preferred_element_type=jnp.float32)

    o_ref[0] = (acc + b_ref[...]).astype(o_ref.dtype)


def _divisors(n):
    return [d for d in range(1, n + 1) if n % d == 0]


def _choose_tiling(BT, N, c_in, c_out, target_rows):
    """Pick (lane pack factor g, timesteps-per-block t_rows)."""
    # lane packing: for small graphs pack g independent (b,t) slices on lanes
    g = 1
    if N <= 64:
        for d in _divisors(BT):
            if d * N <= 128:
                g = d
    M = BT // g                              # (b,t) positions on the row axis
    # rows per block = t_rows*c_in ; cap both input & output row counts so the
    # kron(I_t, W_k) FLOP inflation / resident-weight size stay bounded.
    t_rows = 1
    for d in _divisors(M):
        if d * c_in <= target_rows and d * c_out <= target_rows:
            t_rows = d
    # prefer >= 2 grid steps so both v7x TensorCores get work
    if M // t_rows < 2 and M >= 2:
        best = 1
        for d in _divisors(M):
            if M // d >= 2 and d * c_in <= target_rows and d * c_out <= target_rows:
                best = d
        t_rows = best
    return g, t_rows


def mixprop_forward(x, adj, w_mlp, b_mlp, *, gdep, alpha,
                    matmul_dtype=jnp.bfloat16, target_rows=512):
    """x: (B, c_in, N, T); adj: (N, N); w_mlp: (c_out, (gdep+1)*c_in, 1, 1)."""
    if adj.ndim != 2:
        # TODO(synk): batched / time-varying adjacency ([B,N,N] or [T,B,N,N])
        # is not implemented in the Pallas path; only the common 2-D case.
        raise NotImplementedError("only 2-D adjacency is supported")
    B, c_in, N, T = x.shape
    c_out = w_mlp.shape[0]
    feat = (gdep + 1) * c_in
    assert w_mlp.shape[1] == feat, (w_mlp.shape, feat)

    BT = B * T
    g, t_rows = _choose_tiling(BT, N, c_in, c_out, target_rows)
    nblocks = BT // (g * t_rows)
    R = t_rows * c_in                        # input rows per block
    Ro = t_rows * c_out                      # output rows per block
    lanes = g * N
    L = ((lanes + 127) // 128) * 128         # lane-dense (multiple of 128)

    # ---- one-time layout plumbing in the wrapper (kernel is pure matmul) ----
    # rows = (t_rows, c_in) with c minor ; lanes = (g, N) with node minor
    xt = jnp.transpose(x, (0, 3, 1, 2)).reshape(nblocks, t_rows, g, c_in, N)
    xp = jnp.transpose(xt, (0, 1, 3, 2, 4)).reshape(nblocks, R, lanes)
    xp = jnp.pad(xp, ((0, 0), (0, 0), (0, L - lanes)))

    # resident adjacency: pre-transposed, (1-alpha) folded in, block-diagonal
    # over the g packed groups, zero-padded on both axes (padded nodes -> 0).
    adj_t = (1.0 - float(alpha)) * jnp.transpose(adj).astype(jnp.float32)
    adj_big = jnp.kron(jnp.eye(g, dtype=jnp.float32), adj_t)
    adj_big = jnp.pad(adj_big,
                      ((0, L - lanes), (0, L - lanes))).astype(matmul_dtype)

    # resident per-hop block-diagonal MLP weights kron(I_t_rows, W_k) and bias
    w2 = w_mlp.reshape(c_out, feat).astype(jnp.float32)
    eye_t = jnp.eye(t_rows, dtype=jnp.float32)
    w_big = jnp.stack([jnp.kron(eye_t, w2[:, k * c_in:(k + 1) * c_in])
                       for k in range(gdep + 1)]).astype(matmul_dtype)
    b_big = jnp.tile(b_mlp.reshape(-1).astype(jnp.float32), t_rows).reshape(Ro, 1)

    # VMEM budget: double-buffered x/out blocks + resident operands + live f32
    # temporaries (x, ax, h, acc) with slack; capped for v7x's 64 MiB VMEM.
    in_bytes = jnp.dtype(x.dtype).itemsize
    mm_bytes = jnp.dtype(matmul_dtype).itemsize
    est = (2 * R * L * in_bytes + 2 * Ro * L * in_bytes
           + 2 * L * L * mm_bytes + 2 * (gdep + 1) * Ro * R * mm_bytes
           + 8 * (R + Ro) * L * 4)
    vmem_limit = int(min(max(2 * est, 32 << 20), 64 << 20))

    kern = functools.partial(_mixprop_kernel, gdep=gdep, alpha=float(alpha),
                             matmul_dtype=matmul_dtype)

    out = pl.pallas_call(
        kern,
        out_shape=jax.ShapeDtypeStruct((nblocks, Ro, L), x.dtype),
        grid_spec=pltpu.PrefetchScalarGridSpec(
            num_scalar_prefetch=0,
            grid=(nblocks,),
            in_specs=[
                pl.BlockSpec((1, R, L), lambda i: (i, 0, 0)),
                pl.BlockSpec((L, L), lambda i: (0, 0)),               # resident
                pl.BlockSpec((gdep + 1, Ro, R), lambda i: (0, 0, 0)),  # resident
                pl.BlockSpec((Ro, 1), lambda i: (0, 0)),               # resident
            ],
            out_specs=pl.BlockSpec((1, Ro, L), lambda i: (i, 0, 0)),
        ),
        compiler_params=pltpu.CompilerParams(
            dimension_semantics=("parallel",),
            vmem_limit_bytes=vmem_limit),
    )(xp, adj_big, w_big, b_big)

    # unpack back to the PyTorch layout (B, c_out, N, T)
    out = out[:, :, :lanes].reshape(nblocks, t_rows, c_out, g, N)
    out = jnp.transpose(out, (0, 1, 3, 2, 4)).reshape(B, T, c_out, N)
    return jnp.transpose(out, (0, 2, 3, 1))


def _reference(x, adj, w_mlp, b_mlp, gdep, alpha):
    """Plain-JAX reference matching the PyTorch MixProp.forward exactly."""
    h = x
    out = [h]
    for _ in range(gdep):
        h = alpha * x + (1 - alpha) * jnp.einsum('bcwt,vw->bcvt', h, adj)
        out.append(h)
    ho = jnp.concatenate(out, axis=1)                      # (B, (G+1)C, N, T)
    w2 = w_mlp.reshape(w_mlp.shape[0], -1)
    return jnp.einsum('bfnt,of->bont', ho, w2) + b_mlp[None, :, None, None]


if __name__ == "__main__":
    # Small shapes consistent with the module: B=2, c_in=4, nodes N=8, T=16
    B, c_in, N, T = 2, 4, 8, 16
    gdep, alpha, c_out = 2, 0.05, 8

    key = jax.random.PRNGKey(0)
    kx, ka, kw, kb = jax.random.split(key, 4)
    x = jax.random.normal(kx, (B, c_in, N, T), dtype=jnp.float32)
    adj = jax.nn.softmax(jax.random.normal(ka, (N, N), dtype=jnp.float32), -1)
    w_mlp = 0.1 * jax.random.normal(kw, (c_out, (gdep + 1) * c_in, 1, 1),
                                    dtype=jnp.float32)
    b_mlp = 0.1 * jax.random.normal(kb, (c_out,), dtype=jnp.float32)

    y = mixprop_forward(x, adj, w_mlp, b_mlp, gdep=gdep, alpha=alpha)
    y = jax.block_until_ready(y)

    y_ref = _reference(x, adj, w_mlp, b_mlp, gdep, alpha)
    assert y.shape == y_ref.shape, (y.shape, y_ref.shape)
    # bf16 matmul operands (f32 accumulation) -> slightly loosened tolerance
    assert jnp.allclose(y, y_ref, rtol=2e-2, atol=2e-2)

    print("KERNEL_OK")
</pallas_src>

<mosaic_0001>
module attributes {stable_mosaic.version = 11 : i64} {
  func.func @_mixprop_kernel(%arg0: i32, %arg1: memref<1x4x128xf32, #tpu.memory_space<vmem>>, %arg2: memref<128x128xbf16, #tpu.memory_space<vmem>>, %arg3: memref<3x8x4xbf16, #tpu.memory_space<vmem>>, %arg4: memref<8x1xf32, #tpu.memory_space<vmem>>, %arg5: memref<1x8x128xf32, #tpu.memory_space<vmem>>) attributes {dimension_semantics = [#tpu.dimension_semantics<parallel>], iteration_bounds = array<i64: 2>, scalar_prefetch = 0 : i64, scratch_operands = 0 : i64, tpu.core_type = #tpu.core_type<tc>, window_params = [{transform_indices = @transform_0, window_bounds = array<i64: 1, 4, 128>}, {pipeline_mode = #tpu.pipeline_mode<synchronous>, transform_indices = @transform_1, window_bounds = array<i64: 128, 128>}, {pipeline_mode = #tpu.pipeline_mode<synchronous>, transform_indices = @transform_2, window_bounds = array<i64: 3, 8, 4>}, {pipeline_mode = #tpu.pipeline_mode<synchronous>, transform_indices = @transform_3, window_bounds = array<i64: 8, 1>}, {transform_indices = @transform_4, window_bounds = array<i64: 1, 8, 128>}]} {
    %c0 = arith.constant 0 : index
    %c0_0 = arith.constant 0 : index
    %c0_1 = arith.constant 0 : index
    %0 = vector.load %arg1[%c0, %c0_0, %c0_1] : memref<1x4x128xf32, #tpu.memory_space<vmem>>, vector<1x4x128xf32>
    %1 = vector.shape_cast %0 : vector<1x4x128xf32> to vector<4x128xf32>
    %c0_2 = arith.constant 0 : index
    %c0_3 = arith.constant 0 : index
    %2 = vector.load %arg2[%c0_2, %c0_3] : memref<128x128xbf16, #tpu.memory_space<vmem>>, vector<128x128xbf16>
    %cst = arith.constant 5.000000e-02 : f32
    %3 = vector.broadcast %cst : f32 to vector<4x128xf32>
    %4 = arith.mulf %3, %1 : vector<4x128xf32>
    %5 = arith.truncf %1 : vector<4x128xf32> to vector<4x128xbf16>
    %c0_4 = arith.constant 0 : index
    %c0_5 = arith.constant 0 : index
    %c0_6 = arith.constant 0 : index
    %6 = vector.load %arg3[%c0_4, %c0_5, %c0_6] : memref<3x8x4xbf16, #tpu.memory_space<vmem>>, vector<1x8x4xbf16>
    %7 = vector.shape_cast %6 : vector<1x8x4xbf16> to vector<8x4xbf16>
    %cst_7 = arith.constant dense<0.000000e+00> : vector<8x128xf32>
    %8 = tpu.matmul %7, %5, %cst_7 {dimension_numbers = #tpu.dot_dimension_numbers<[1], [0], [0], [1], [0, 0, 1, 1], [], []>} : vector<8x4xbf16>, vector<4x128xbf16>, vector<8x128xf32> -> vector<8x128xf32>
    %cst_8 = arith.constant dense<0.000000e+00> : vector<4x128xf32>
    %9 = tpu.matmul %5, %2, %cst_8 {dimension_numbers = #tpu.dot_dimension_numbers<[1], [0], [0], [1], [0, 0, 1, 1], [], []>} : vector<4x128xbf16>, vector<128x128xbf16>, vector<4x128xf32> -> vector<4x128xf32>
    %10 = arith.addf %4, %9 : vector<4x128xf32>
    %11 = arith.truncf %10 : vector<4x128xf32> to vector<4x128xbf16>
    %c1 = arith.constant 1 : index
    %c0_9 = arith.constant 0 : index
    %c0_10 = arith.constant 0 : index
    %12 = vector.load %arg3[%c1, %c0_9, %c0_10] : memref<3x8x4xbf16, #tpu.memory_space<vmem>>, vector<1x8x4xbf16>
    %13 = vector.shape_cast %12 : vector<1x8x4xbf16> to vector<8x4xbf16>
    %cst_11 = arith.constant dense<0.000000e+00> : vector<8x128xf32>
    %14 = tpu.matmul %13, %11, %cst_11 {dimension_numbers = #tpu.dot_dimension_numbers<[1], [0], [0], [1], [0, 0, 1, 1], [], []>} : vector<8x4xbf16>, vector<4x128xbf16>, vector<8x128xf32> -> vector<8x128xf32>
    %15 = arith.addf %8, %14 : vector<8x128xf32>
    %cst_12 = arith.constant dense<0.000000e+00> : vector<4x128xf32>
    %16 = tpu.matmul %11, %2, %cst_12 {dimension_numbers = #tpu.dot_dimension_numbers<[1], [0], [0], [1], [0, 0, 1, 1], [], []>} : vector<4x128xbf16>, vector<128x128xbf16>, vector<4x128xf32> -> vector<4x128xf32>
    %17 = arith.addf %4, %16 : vector<4x128xf32>
    %18 = arith.truncf %17 : vector<4x128xf32> to vector<4x128xbf16>
    %c2 = arith.constant 2 : index
    %c0_13 = arith.constant 0 : index
    %c0_14 = arith.constant 0 : index
    %19 = vector.load %arg3[%c2, %c0_13, %c0_14] : memref<3x8x4xbf16, #tpu.memory_space<vmem>>, vector<1x8x4xbf16>
    %20 = vector.shape_cast %19 : vector<1x8x4xbf16> to vector<8x4xbf16>
    %cst_15 = arith.constant dense<0.000000e+00> : vector<8x128xf32>
    %21 = tpu.matmul %20, %18, %cst_15 {dimension_numbers = #tpu.dot_dimension_numbers<[1], [0], [0], [1], [0, 0, 1, 1], [], []>} : vector<8x4xbf16>, vector<4x128xbf16>, vector<8x128xf32> -> vector<8x128xf32>
    %22 = arith.addf %15, %21 : vector<8x128xf32>
    %c0_16 = arith.constant 0 : index
    %c0_17 = arith.constant 0 : index
    %23 = vector.load %arg4[%c0_16, %c0_17] : memref<8x1xf32, #tpu.memory_space<vmem>>, vector<8x1xf32>
    %24 = vector.broadcast %23 : vector<8x1xf32> to vector<8x128xf32>
    %25 = arith.addf %22, %24 : vector<8x128xf32>
    %c0_18 = arith.constant 0 : index
    %c0_19 = arith.constant 0 : index
    %c0_20 = arith.constant 0 : index
    %26 = vector.load %arg5[%c0_18, %c0_19, %c0_20] : memref<1x8x128xf32, #tpu.memory_space<vmem>>, vector<1x8x128xf32>
    %27 = vector.shape_cast %26 : vector<1x8x128xf32> to vector<8x128xf32>
    %28 = vector.shape_cast %25 : vector<8x128xf32> to vector<1x8x128xf32>
    tpu.vector_store %arg5[%c0_18, %c0_19, %c0_20], %28 {strides = array<i32>} : memref<1x8x128xf32, #tpu.memory_space<vmem>>, vector<1x8x128xf32>,
    return
  }
  func.func @transform_0(%arg0: i32) -> (i32, i32, i32) {
    %c0_i32 = arith.constant 0 : i32
    %c0_i32_0 = arith.constant 0 : i32
    %c0_i32_1 = arith.constant 0 : i32
    return %arg0, %c0_i32, %c0_i32_0 : i32, i32, i32
  }
  func.func @transform_1(%arg0: i32) -> (i32, i32) {
    %c0_i32 = arith.constant 0 : i32
    %c0_i32_0 = arith.constant 0 : i32
    %c0_i32_1 = arith.constant 0 : i32
    return %c0_i32, %c0_i32_0 : i32, i32
  }
  func.func @transform_2(%arg0: i32) -> (i32, i32, i32) {
    %c0_i32 = arith.constant 0 : i32
    %c0_i32_0 = arith.constant 0 : i32
    %c0_i32_1 = arith.constant 0 : i32
    %c0_i32_2 = arith.constant 0 : i32
    return %c0_i32, %c0_i32_0, %c0_i32_1 : i32, i32, i32
  }
  func.func @transform_3(%arg0: i32) -> (i32, i32) {
    %c0_i32 = arith.constant 0 : i32
    %c0_i32_0 = arith.constant 0 : i32
    %c0_i32_1 = arith.constant 0 : i32
    return %c0_i32, %c0_i32_0 : i32, i32
  }
  func.func @transform_4(%arg0: i32) -> (i32, i32, i32) {
    %c0_i32 = arith.constant 0 : i32
    %c0_i32_0 = arith.constant 0 : i32
    %c0_i32_1 = arith.constant 0 : i32
    return %arg0, %c0_i32, %c0_i32_0 : i32, i32, i32
  }
}

</mosaic_0001>

<llo_original>
// kernel: tpu_custom_call.1
$region0: #{tpu_custom_call.1}
  #allocation0 [shape = 'u32[]', space=smem, size = 0x4, offset = 0x4, fixed_abs, tag = 'smem constant byte address 0x4 - core index']
  #allocation1 [shape = 'u32[144,128]{1,0:T(1,128)}', space=vmem, size = 0x12000, scoped, tag = 'internal scratch']
  %s0 = inlined_call_operand.vmem [shape: f32[2,4,128], index: 0, kind: input, shape index: {}]
  %s1 = inlined_call_operand.hbm [shape: bf16[128,128], index: 1, kind: input, shape index: {}]
  %s2 = inlined_call_operand.vmem [shape: bf16[3,8,4], index: 2, kind: input, shape index: {}]
  %s3 = inlined_call_operand.vmem [shape: f32[8,1], index: 3, kind: input, shape index: {}]
  %s4 = inlined_call_operand.hbm [shape: f32[2,8,128], index: 4, kind: output, shape index: {}]
  %s5 = sld [smem:[#allocation0]]
  $region53: #{tpu_custom_call.1} parent=0
    _
  %s7 = ssub.s32 1, %s5
  %s8 = scalar_select 0, %s7, %s5
  $region1: #{tpu_custom_call.1} parent=0
    #allocation2 [shape = 'u8[32768]{0}', space=vmem, size = 0x8000, scoped, tag = 'input window, operand 1, single buffered']
    #allocation3 [shape = 's32[2]{0}', space=sflag, size = 0x8, scoped, tag = 'scoped memory for tpu_custom_call.1']
    #allocation4 [shape = 's32[2]{0}', space=sflag, size = 0x8, scoped, tag = 'scoped memory for tpu_custom_call.1']
    #allocation5 [shape = 'u8[8192]{0}', space=vmem, size = 0x2000, scoped, tag = 'output window, operand 0']
    %9 = vsyncpa [#allocation3], 0
    %10 = vsyncpa [#allocation4], 0
    %s11 = scalar_lea.sflag [#allocation4], 1
    %12 = vsyncpa %s11, 0
    loop: start=0, step=1, limit=4
    $region2: #{tpu_custom_call.1} parent=1 // loop_pre_header
      _
    $region3: #{tpu_custom_call.1} parent=1 // loop_header
      %s14 = sphi 0, %s18
      %p15 = scmp.ge.s32.totalorder %s14, 4
      %s24 = sphi 0, %s26
      %s27 = sphi 0, %s24
      %s28 = sphi 0, %s27
      %s44 = sphi 0, %s28
      %s48 = sphi 0, %s48
      %s50 = sphi 0, %s48
      %s51 = sphi 0, %s50
      %s65 = sphi 0, %s51
      %s69 = sphi 0, %s69
      %s71 = sphi 0, %s69
      %s72 = sphi 0, %s71
      %s86 = sphi 0, %s72
      %s90 = sphi 0, %s90
      %s92 = sphi 0, %s90
      %s93 = sphi 0, %s92
      %s107 = sphi 0, %s93
      %s113 = sphi 0, %s115
      %s116 = sphi 0, %s113
      %s117 = sphi 0, %s116
      %s133 = sphi 0, %s117
    $region4: #{tpu_custom_call.1} parent=1 // loop_header_branch
      %17 = sbr.rel (%p15) target = $region8
    $region5: #{tpu_custom_call.1} parent=1 // loop_body
      %s19 = ssub.s32 %s14, 1
      %s20 = ssub.s32 %s14, 2
      %s21 = sadd.s32 %s14, 1
      %s22 = ssub.s32 %s14, %s21
      %p23 = scmp.eq.s32.totalorder %s22, 0
      %s25 = sadd.s32 %s24, 1
      %s26 = scalar_select %p23, %s24, %s25
      %p29 = pneg %p23
      %p30 = scmp.eq.s32.totalorder %s14, 1
      %p31 = por %p29, %p30
      %p32 = scmp.ne.s32.totalorder %s24, %s27
      %p33 = scmp.eq.s32.totalorder %s14, 0
      %p34 = por %p32, %p33
      %p35 = scmp.ne.s32.totalorder %s24, %s27
      %p36 = scmp.eq.s32.totalorder %s19, 1
      %p37 = por %p35, %p36
      %p38 = scmp.ne.s32.totalorder %s27, %s28
      %p39 = scmp.eq.s32.totalorder %s19, 0
      %p40 = por %p38, %p39
      %p41 = scmp.ne.s32.totalorder %s27, %s28
      %p42 = scmp.eq.s32.totalorder %s20, 1
      %p43 = por %p41, %p42
      %p45 = scmp.ne.s32.totalorder %s28, %s44
      %p46 = scmp.eq.s32.totalorder %s20, 0
      %p47 = por %p45, %p46
      %s49 = sadd.s32 %s48, 1
      %p52 = scmp.eq.s32.totalorder %s14, 1
      %p53 = scmp.ne.s32.totalorder %s48, %s50
      %p54 = scmp.eq.s32.totalorder %s14, 0
      %p55 = por %p53, %p54
      %p56 = scmp.ne.s32.totalorder %s48, %s50
      %p57 = scmp.eq.s32.totalorder %s19, 1
      %p58 = por %p56, %p57
      %p59 = scmp.ne.s32.totalorder %s50, %s51
      %p60 = scmp.eq.s32.totalorder %s19, 0
      %p61 = por %p59, %p60
      %p62 = scmp.ne.s32.totalorder %s50, %s51
      %p63 = scmp.eq.s32.totalorder %s20, 1
      %p64 = por %p62, %p63
      %p66 = scmp.ne.s32.totalorder %s51, %s65
      %p67 = scmp.eq.s32.totalorder %s20, 0
      %p68 = por %p66, %p67
      %s70 = sadd.s32 %s69, 1
      %p73 = scmp.eq.s32.totalorder %s14, 1
      %p74 = scmp.ne.s32.totalorder %s69, %s71
      %p75 = scmp.eq.s32.totalorder %s14, 0
      %p76 = por %p74, %p75
      %p77 = scmp.ne.s32.totalorder %s69, %s71
      %p78 = scmp.eq.s32.totalorder %s19, 1
      %p79 = por %p77, %p78
      %p80 = scmp.ne.s32.totalorder %s71, %s72
      %p81 = scmp.eq.s32.totalorder %s19, 0
      %p82 = por %p80, %p81
      %p83 = scmp.ne.s32.totalorder %s71, %s72
      %p84 = scmp.eq.s32.totalorder %s20, 1
      %p85 = por %p83, %p84
      %p87 = scmp.ne.s32.totalorder %s72, %s86
      %p88 = scmp.eq.s32.totalorder %s20, 0
      %p89 = por %p87, %p88
      %s91 = sadd.s32 %s90, 1
      %p94 = scmp.eq.s32.totalorder %s14, 1
      %p95 = scmp.ne.s32.totalorder %s90, %s92
      %p96 = scmp.eq.s32.totalorder %s14, 0
      %p97 = por %p95, %p96
      %p98 = scmp.ne.s32.totalorder %s90, %s92
      %p99 = scmp.eq.s32.totalorder %s19, 1
      %p100 = por %p98, %p99
      %p101 = scmp.ne.s32.totalorder %s92, %s93
      %p102 = scmp.eq.s32.totalorder %s19, 0
      %p103 = por %p101, %p102
      %p104 = scmp.ne.s32.totalorder %s92, %s93
      %p105 = scmp.eq.s32.totalorder %s20, 1
      %p106 = por %p104, %p105
      %p108 = scmp.ne.s32.totalorder %s93, %s107
      %p109 = scmp.eq.s32.totalorder %s20, 0
      %p110 = por %p108, %p109
      %s111 = ssub.s32 %s14, %s21
      %p112 = scmp.eq.s32.totalorder %s111, 0
      %s114 = sadd.s32 %s113, 1
      %s115 = scalar_select %p112, %s113, %s114
      %p118 = pneg %p112
      %p119 = scmp.eq.s32.totalorder %s14, 1
      %p120 = por %p118, %p119
      %p121 = scmp.ne.s32.totalorder %s113, %s116
      %p122 = scmp.eq.s32.totalorder %s14, 0
      %p123 = por %p121, %p122
      %p124 = scmp.ne.s32.totalorder %s113, %s116
      %p125 = scmp.eq.s32.totalorder %s19, 1
      %p126 = por %p124, %p125
      %p127 = scmp.ne.s32.totalorder %s116, %s117
      %p128 = scmp.eq.s32.totalorder %s19, 0
      %p129 = por %p127, %p128
      %p130 = scmp.ne.s32.totalorder %s116, %s117
      %p131 = scmp.eq.s32.totalorder %s20, 1
      %p132 = por %p130, %p131
      %p134 = scmp.ne.s32.totalorder %s117, %s133
      %p135 = scmp.eq.s32.totalorder %s20, 0
      %p136 = por %p134, %p135
      %p137 = scmp.le.s32.totalorder 1, %s14
      %p138 = scmp.lt.s32.totalorder %s14, 3
      %p139 = pnand %p137, %p138
      %p140 = pneg %p139
      // Predicated region
      $region9: #{tpu_custom_call.1} parent=5 // pred_check
        _
      $region10: #{tpu_custom_call.1} parent=5 // pred_check_branch
        %142 = sbr.rel (%p139) target = $region12
      $region11: #{tpu_custom_call.1} parent=5 // pred_region
        %s143 = ssub.s32 %s14, 1
        // Predicated region
        $region13: #{tpu_custom_call.1} parent=11 // pred_check
          %p144 = pneg %p61
        $region14: #{tpu_custom_call.1} parent=11 // pred_check_branch
          %146 = sbr.rel (%p144) target = $region16
        $region15: #{tpu_custom_call.1} parent=11 // pred_region
          %s148 = ssub.s32 1024, 1024
          %149 = vsyncadd [#allocation3], %s148
          %s150 = sshll.u32 [#allocation2], 4
          %s151 = int_to_ptr.vmem [resolvable:$true] %s150
          %156 = dma.hbm_to_vmem [thread:$0]  %s1, 1024, %s151, [#allocation3], 64, 64, 4
        $region16: #{tpu_custom_call.1} parent=11 // pred_fallthru
          _
        // Predicated region
        $region17: #{tpu_custom_call.1} parent=11 // pred_check
          %p157 = pneg %p82
        $region18: #{tpu_custom_call.1} parent=11 // pred_check_branch
          %159 = sbr.rel (%p157) target = $region20
        $region19: #{tpu_custom_call.1} parent=11 // pred_region
          _
        $region20: #{tpu_custom_call.1} parent=11 // pred_fallthru
          _
        // Predicated region
        $region21: #{tpu_custom_call.1} parent=11 // pred_check
          %p160 = pneg %p103
        $region22: #{tpu_custom_call.1} parent=11 // pred_check_branch
          %162 = sbr.rel (%p160) target = $region24
        $region23: #{tpu_custom_call.1} parent=11 // pred_region
          _
        $region24: #{tpu_custom_call.1} parent=11 // pred_fallthru
          _
      $region12: #{tpu_custom_call.1} parent=5 // pred_fallthru
        _
      %p163 = scmp.lt.s32.totalorder %s14, 2
      // Predicated region
      $region25: #{tpu_custom_call.1} parent=5 // pred_check
        %p164 = pneg %p163
      $region26: #{tpu_custom_call.1} parent=5 // pred_check_branch
        %166 = sbr.rel (%p164) target = $region28
      $region27: #{tpu_custom_call.1} parent=5 // pred_region
        // Predicated region
        $region29: #{tpu_custom_call.1} parent=27 // pred_check
          %p167 = pneg %p34
        $region30: #{tpu_custom_call.1} parent=27 // pred_check_branch
          %169 = sbr.rel (%p167) target = $region32
        $region31: #{tpu_custom_call.1} parent=27 // pred_region
          %p170 = scmp.lt.s32.totalorder %s14, 1
          %s171 = scalar_select %p170, %s14, 1
          %s172 = smul.addr %s171, 4
          %s173 = scalar_lea.vmem %s0, %s172
        $region32: #{tpu_custom_call.1} parent=27 // pred_fallthru
          _
      $region28: #{tpu_custom_call.1} parent=5 // pred_fallthru
        _
      %p174 = scmp.le.s32.totalorder 1, %s14
      %p175 = scmp.lt.s32.totalorder %s14, 3
      %p176 = pnand %p174, %p175
      %p177 = pneg %p176
      // Predicated region
      $region33: #{tpu_custom_call.1} parent=5 // pred_check
        _
      $region34: #{tpu_custom_call.1} parent=5 // pred_check_branch
        %179 = sbr.rel (%p176) target = $region36
      $region35: #{tpu_custom_call.1} parent=5 // pred_region
        %s180 = ssub.s32 %s14, 1
        // Predicated region
        $region37: #{tpu_custom_call.1} parent=35 // pred_check
          %p181 = pneg %p61
        $region38: #{tpu_custom_call.1} parent=35 // pred_check_branch
          %183 = sbr.rel (%p181) target = $region40
        $region39: #{tpu_custom_call.1} parent=35 // pred_region
          %184 = dma.done [#allocation3], 1024
        $region40: #{tpu_custom_call.1} parent=35 // pred_fallthru
          _
        %p185 = scmp.lt.s32.totalorder %s19, 1
        %s186 = scalar_select %p185, %s19, 1
        %s187 = smul.addr %s186, 4
        %s188 = scalar_lea.vmem %s0, %s187
        %p189 = pneg %p40
        %p190 = pneg %p37
        %p191 = pneg %p61
        %p192 = pneg %p58
        %p193 = pneg %p82
        %p194 = pneg %p79
        %p195 = pneg %p103
        %p196 = pneg %p100
        %p197 = pneg %p129
        %p198 = pneg %p126
        %s199 = sand.u32 %s116, 1
        %s200 = scalar_lea.sflag [#allocation4], %s199
        %s201 = sand.u32 %s116, 1
        %s202 = smul.addr %s201, 8
        %s203 = scalar_lea.vmem [#allocation5], %s202
        %p204 = scmp.lt.s32.totalorder %s19, 1
        %s205 = scalar_select %p204, %s19, 1
        %s206 = smul.addr %s205, 4
        %s207 = scalar_lea.vmem %s0, %s206
        %v209 = vld [vmem:[%s207] sm:$0xf]
        %v210 = vld [vmem:[#allocation2] sm:$0xf]
        %v211 = vld [vmem:[#allocation2 + $0x4] sm:$0xf]
        %v212 = vld [vmem:[#allocation2 + $0x8] sm:$0xf]
        %v213 = vld [vmem:[#allocation2 + $0xc] sm:$0xf]
        %v214 = vld [vmem:[#allocation2 + $0x10] sm:$0xf]
        %v215 = vld [vmem:[#allocation2 + $0x14] sm:$0xf]
        %v216 = vld [vmem:[#allocation2 + $0x18] sm:$0xf]
        %v217 = vld [vmem:[#allocation2 + $0x1c] sm:$0xf]
        %v218 = vld [vmem:[#allocation2 + $0x20] sm:$0xf]
        %v219 = vld [vmem:[#allocation2 + $0x24] sm:$0xf]
        %v220 = vld [vmem:[#allocation2 + $0x28] sm:$0xf]
        %v221 = vld [vmem:[#allocation2 + $0x2c] sm:$0xf]
        %v222 = vld [vmem:[#allocation2 + $0x30] sm:$0xf]
        %v223 = vld [vmem:[#allocation2 + $0x34] sm:$0xf]
        %v224 = vld [vmem:[#allocation2 + $0x38] sm:$0xf]
        %v225 = vld [vmem:[#allocation2 + $0x3c] sm:$0xf]
        %v226 = vmul.f32 %v209, 0.05
        %v227 = vpack.c.bf16 %v209, %v209
        %v228 = vld [vmem:[%s2] sm:$0xf]
        %v245 = vunpack.c.l.b16 %v210
        %v246 = vunpack.c.l.b16 %v211
        %v247 = vunpack.c.l.b16 %v212
        %v248 = vunpack.c.l.b16 %v213
        %v249 = vunpack.c.l.b16 %v214
        %v250 = vunpack.c.l.b16 %v215
        %v251 = vunpack.c.l.b16 %v216
        %v252 = vunpack.c.l.b16 %v217
        %v253 = vunpack.c.l.b16 %v218
        %v254 = vunpack.c.l.b16 %v219
        %v255 = vunpack.c.l.b16 %v220
        %v256 = vunpack.c.l.b16 %v221
        %v257 = vunpack.c.l.b16 %v222
        %v258 = vunpack.c.l.b16 %v223
        %v259 = vunpack.c.l.b16 %v224
        %v260 = vunpack.c.l.b16 %v225
        %v261 = vpack.c.b16 %v246, %v245
        %v262 = vpack.c.b16 %v248, %v247
        %v263 = vpack.c.b16 %v250, %v249
        %v264 = vpack.c.b16 %v252, %v251
        %v265 = vpack.c.b16 %v254, %v253
        %v266 = vpack.c.b16 %v256, %v255
        %v267 = vpack.c.b16 %v258, %v257
        %v268 = vpack.c.b16 %v260, %v259
        %277 = vmatprep.subr.bf16.mxu0 0
        %278 = vmatpush1.bf16.msra.mxu0 %v268
        %279 = vmatprep.subr.bf16.mxu0 0
        %280 = vmatpush1.bf16.msra.mxu0 %v267
        %281 = vmatprep.subr.bf16.mxu0 0
        %282 = vmatpush1.bf16.msra.mxu0 %v266
        %283 = vmatprep.subr.bf16.mxu0 0
        %284 = vmatpush1.bf16.msra.mxu0 %v265
        %285 = vmatprep.subr.bf16.mxu0 0
        %286 = vmatpush1.bf16.msra.mxu0 %v264
        %287 = vmatprep.subr.bf16.mxu0 0
        %288 = vmatpush1.bf16.msra.mxu0 %v263
        %289 = vmatprep.subr.bf16.mxu0 0
        %290 = vmatpush1.bf16.msra.mxu0 %v262
        %291 = vmatprep.subr.bf16.mxu0 0
        %292 = vmatpush1.bf16.msra.mxu0 %v261
        %293 = vmatprep.subr.bf16.mxu0 0
        %294 = vmatpush2.bf16.msra.mxu0 0
        %295 = vmatprep.subr.bf16.mxu0 0
        %296 = vmatpush2.bf16.msra.mxu0 0
        %297 = vmatprep.subr.bf16.mxu0 0
        %298 = vmatpush2.bf16.msra.mxu0 0
        %299 = vmatprep.subr.bf16.mxu0 0
        %300 = vmatpush2.bf16.msra.mxu0 0
        %301 = vmatprep.subr.bf16.mxu0 0
        %302 = vmatpush2.bf16.msra.mxu0 0
        %303 = vmatprep.subr.bf16.mxu0 0
        %304 = vmatpush2.bf16.msra.mxu0 0
        %305 = vmatprep.subr.bf16.mxu0 0
        %306 = vmatpush2.bf16.msra.mxu0 0
        %307 = vmatprep.subr.bf16.mxu0 0
        %308 = vmatpush2.bf16.msra.mxu0 0
        %309 = vmatprep.mubr.bf16.mxu0 0
        %310 = vmatmul.mubr.bf16.gmra.mxu0 %v227
        %v311 = vpop.f32.mrf.mxu0
        %v312 = vadd.f32 0.0, %v311
        %v313 = vpop.f32.mrf.mxu0
        %v314 = vpop.f32.mrf.mxu0
        %v315 = vpop.f32.mrf.mxu0
        %316 = vdwg.mxu0
        %v317 = vadd.f32 %v226, %v312
        %v318 = vpack.c.bf16 %v317, %v317
        %s319 = scalar_lea.vmem %s2, 4
        %v320 = vld [vmem:[%s319] sm:$0xf]
        %vm321 = vcmask 31744
        %v323 = vsel %vm321, %v320, 0
        %vm325 = vcmask 1041408
        %v327 = vsel %vm325, %v318, 0
        %329 = vmatprep.subr.bf16.mxu0 0
        %330 = vmatpush1.bf16.msra.mxu0 0
        %331 = vmatprep.subr.bf16.mxu0 0
        %332 = vmatpush1.bf16.msra.mxu0 0
        %333 = vmatprep.subr.bf16.mxu0 0
        %334 = vmatpush1.bf16.msra.mxu0 0
        %335 = vmatprep.subr.bf16.mxu0 0
        %336 = vmatpush1.bf16.msra.mxu0 0
        %337 = vmatprep.subr.bf16.mxu0 0
        %338 = vmatpush1.bf16.msra.mxu0 0
        %339 = vmatprep.subr.bf16.mxu0 0
        %340 = vmatpush1.bf16.msra.mxu0 0
        %341 = vmatprep.subr.bf16.mxu0 0
        %342 = vmatpush1.bf16.msra.mxu0 0
        %343 = vmatprep.subr.bf16.mxu0 0
        %344 = vmatpush1.bf16.msra.mxu0 %v327
        %345 = vmatprep.subr.bf16.mxu0 0
        %346 = vmatpush2.bf16.msra.mxu0 0
        %347 = vmatprep.subr.bf16.mxu0 0
        %348 = vmatpush2.bf16.msra.mxu0 0
        %349 = vmatprep.subr.bf16.mxu0 0
        %350 = vmatpush2.bf16.msra.mxu0 0
        %351 = vmatprep.subr.bf16.mxu0 0
        %352 = vmatpush2.bf16.msra.mxu0 0
        %353 = vmatprep.subr.bf16.mxu0 0
        %354 = vmatpush2.bf16.msra.mxu0 0
        %355 = vmatprep.subr.bf16.mxu0 0
        %356 = vmatpush2.bf16.msra.mxu0 0
        %357 = vmatprep.subr.bf16.mxu0 0
        %358 = vmatpush2.bf16.msra.mxu0 0
        %359 = vmatprep.subr.bf16.mxu0 0
        %360 = vmatpush2.bf16.msra.mxu0 0
        %361 = vmatprep.mubr.bf16.mxu0 0
        %362 = vmatmul.mubr.bf16.gmra.mxu0 %v323
        %v363 = vpop.f32.mrf.mxu0
        %v364 = vadd.f32 0.0, %v363
        %v365 = vpop.f32.mrf.mxu0
        %v366 = vpop.f32.mrf.mxu0
        %v367 = vpop.f32.mrf.mxu0
        %368 = vdwg.mxu0
        %v370 = vsel %vm321, %v228, 0
        %v373 = vsel %vm325, %v227, 0
        %375 = vmatprep.subr.bf16.mxu0 0
        %376 = vmatpush1.bf16.msra.mxu0 0
        %377 = vmatprep.subr.bf16.mxu0 0
        %378 = vmatpush1.bf16.msra.mxu0 0
        %379 = vmatprep.subr.bf16.mxu0 0
        %380 = vmatpush1.bf16.msra.mxu0 0
        %381 = vmatprep.subr.bf16.mxu0 0
        %382 = vmatpush1.bf16.msra.mxu0 0
        %383 = vmatprep.subr.bf16.mxu0 0
        %384 = vmatpush1.bf16.msra.mxu0 0
        %385 = vmatprep.subr.bf16.mxu0 0
        %386 = vmatpush1.bf16.msra.mxu0 0
        %387 = vmatprep.subr.bf16.mxu0 0
        %388 = vmatpush1.bf16.msra.mxu0 0
        %389 = vmatprep.subr.bf16.mxu0 0
        %390 = vmatpush1.bf16.msra.mxu0 %v373
        %391 = vmatprep.subr.bf16.mxu0 0
        %392 = vmatpush2.bf16.msra.mxu0 0
        %393 = vmatprep.subr.bf16.mxu0 0
        %394 = vmatpush2.bf16.msra.mxu0 0
        %395 = vmatprep.subr.bf16.mxu0 0
        %396 = vmatpush2.bf16.msra.mxu0 0
        %397 = vmatprep.subr.bf16.mxu0 0
        %398 = vmatpush2.bf16.msra.mxu0 0
        %399 = vmatprep.subr.bf16.mxu0 0
        %400 = vmatpush2.bf16.msra.mxu0 0
        %401 = vmatprep.subr.bf16.mxu0 0
        %402 = vmatpush2.bf16.msra.mxu0 0
        %403 = vmatprep.subr.bf16.mxu0 0
        %404 = vmatpush2.bf16.msra.mxu0 0
        %405 = vmatprep.subr.bf16.mxu0 0
        %406 = vmatpush2.bf16.msra.mxu0 0
        %407 = vmatprep.mubr.bf16.mxu0 0
        %408 = vmatmul.mubr.bf16.gmra.mxu0 %v370
        %v409 = vpop.f32.mrf.mxu0
        %v410 = vadd.f32 %v364, %v409
        %v411 = vpop.f32.mrf.mxu0
        %v412 = vpop.f32.mrf.mxu0
        %v413 = vpop.f32.mrf.mxu0
        %414 = vdwg.mxu0
        %415 = vmatprep.subr.bf16.mxu0 0
        %416 = vmatpush1.bf16.msra.mxu0 %v268
        %417 = vmatprep.subr.bf16.mxu0 0
        %418 = vmatpush1.bf16.msra.mxu0 %v267
        %419 = vmatprep.subr.bf16.mxu0 0
        %420 = vmatpush1.bf16.msra.mxu0 %v266
        %421 = vmatprep.subr.bf16.mxu0 0
        %422 = vmatpush1.bf16.msra.mxu0 %v265
        %423 = vmatprep.subr.bf16.mxu0 0
        %424 = vmatpush1.bf16.msra.mxu0 %v264
        %425 = vmatprep.subr.bf16.mxu0 0
        %426 = vmatpush1.bf16.msra.mxu0 %v263
        %427 = vmatprep.subr.bf16.mxu0 0
        %428 = vmatpush1.bf16.msra.mxu0 %v262
        %429 = vmatprep.subr.bf16.mxu0 0
        %430 = vmatpush1.bf16.msra.mxu0 %v261
        %431 = vmatprep.subr.bf16.mxu0 0
        %432 = vmatpush2.bf16.msra.mxu0 0
        %433 = vmatprep.subr.bf16.mxu0 0
        %434 = vmatpush2.bf16.msra.mxu0 0
        %435 = vmatprep.subr.bf16.mxu0 0
        %436 = vmatpush2.bf16.msra.mxu0 0
        %437 = vmatprep.subr.bf16.mxu0 0
        %438 = vmatpush2.bf16.msra.mxu0 0
        %439 = vmatprep.subr.bf16.mxu0 0
        %440 = vmatpush2.bf16.msra.mxu0 0
        %441 = vmatprep.subr.bf16.mxu0 0
        %442 = vmatpush2.bf16.msra.mxu0 0
        %443 = vmatprep.subr.bf16.mxu0 0
        %444 = vmatpush2.bf16.msra.mxu0 0
        %445 = vmatprep.subr.bf16.mxu0 0
        %446 = vmatpush2.bf16.msra.mxu0 0
        %447 = vmatprep.mubr.bf16.mxu0 0
        %448 = vmatmul.mubr.bf16.gmra.mxu0 %v318
        %v449 = vpop.f32.mrf.mxu0
        %v450 = vadd.f32 0.0, %v449
        %v451 = vpop.f32.mrf.mxu0
        %v452 = vpop.f32.mrf.mxu0
        %v453 = vpop.f32.mrf.mxu0
        %454 = vdwg.mxu0
        %v455 = vadd.f32 %v226, %v450
        %v456 = vpack.c.bf16 %v455, %v455
        %s457 = scalar_lea.vmem %s2, 8
        %v458 = vld [vmem:[%s457] sm:$0xf]
        %v460 = vsel %vm321, %v458, 0
        %v463 = vsel %vm325, %v456, 0
        %465 = vmatprep.subr.bf16.mxu0 0
        %466 = vmatpush1.bf16.msra.mxu0 0
        %467 = vmatprep.subr.bf16.mxu0 0
        %468 = vmatpush1.bf16.msra.mxu0 0
        %469 = vmatprep.subr.bf16.mxu0 0
        %470 = vmatpush1.bf16.msra.mxu0 0
        %471 = vmatprep.subr.bf16.mxu0 0
        %472 = vmatpush1.bf16.msra.mxu0 0
        %473 = vmatprep.subr.bf16.mxu0 0
        %474 = vmatpush1.bf16.msra.mxu0 0
        %475 = vmatprep.subr.bf16.mxu0 0
        %476 = vmatpush1.bf16.msra.mxu0 0
        %477 = vmatprep.subr.bf16.mxu0 0
        %478 = vmatpush1.bf16.msra.mxu0 0
        %479 = vmatprep.subr.bf16.mxu0 0
        %480 = vmatpush1.bf16.msra.mxu0 %v463
        %481 = vmatprep.subr.bf16.mxu0 0
        %482 = vmatpush2.bf16.msra.mxu0 0
        %483 = vmatprep.subr.bf16.mxu0 0
        %484 = vmatpush2.bf16.msra.mxu0 0
        %485 = vmatprep.subr.bf16.mxu0 0
        %486 = vmatpush2.bf16.msra.mxu0 0
        %487 = vmatprep.subr.bf16.mxu0 0
        %488 = vmatpush2.bf16.msra.mxu0 0
        %489 = vmatprep.subr.bf16.mxu0 0
        %490 = vmatpush2.bf16.msra.mxu0 0
        %491 = vmatprep.subr.bf16.mxu0 0
        %492 = vmatpush2.bf16.msra.mxu0 0
        %493 = vmatprep.subr.bf16.mxu0 0
        %494 = vmatpush2.bf16.msra.mxu0 0
        %495 = vmatprep.subr.bf16.mxu0 0
        %496 = vmatpush2.bf16.msra.mxu0 0
        %497 = vmatprep.mubr.bf16.mxu0 0
        %498 = vmatmul.mubr.bf16.gmra.mxu0 %v460
        %v499 = vpop.f32.mrf.mxu0
        %v500 = vadd.f32 0.0, %v499
        %v501 = vpop.f32.mrf.mxu0
        %v502 = vpop.f32.mrf.mxu0
        %v503 = vpop.f32.mrf.mxu0
        %504 = vdwg.mxu0
        %v505 = vadd.f32 %v410, %v500
        %v506 = vld [vmem:[%s3] sm:$0xff]
        %508 = vset.pattern.permute.xlu0 0
        %509 = vperm.xlu0 %508, %v506
        %v510 = vpop.permute.xlu0 %509
        %v512 = vadd.f32 %v505, %v510
        %513 = vst [vmem:[%s203] sm:$0xff] %v512
        %s514 = sand.u32 %s116, 1
        %s515 = scalar_lea.sflag [#allocation4], %s514
        %s516 = sand.u32 %s116, 1
        %s517 = smul.addr %s516, 8
        %s518 = scalar_lea.vmem [#allocation5], %s517
        // Predicated region
        $region41: #{tpu_custom_call.1} parent=35 // pred_check
          %p519 = pneg %p126
        $region42: #{tpu_custom_call.1} parent=35 // pred_check_branch
          %521 = sbr.rel (%p519) target = $region44
        $region43: #{tpu_custom_call.1} parent=35 // pred_region
          %s523 = ssub.s32 128, 128
          %524 = vsyncadd %s515, %s523
          %s525 = smul.addr %s19, 128
          %s526 = scalar_lea.hbm %s4, %s525
          %s528 = sshll.u32 %s518, 4
          %s529 = int_to_ptr.vmem [resolvable:$true] %s528
          %531 = dma.vmem_to_hbm [thread:$0]  %s529, 128, %s526, %s515
        $region44: #{tpu_custom_call.1} parent=35 // pred_fallthru
          _
      $region36: #{tpu_custom_call.1} parent=5 // pred_fallthru
        _
      %p532 = scmp.le.s32.totalorder 2, %s14
      // Predicated region
      $region45: #{tpu_custom_call.1} parent=5 // pred_check
        %p533 = pneg %p532
      $region46: #{tpu_custom_call.1} parent=5 // pred_check_branch
        %535 = sbr.rel (%p533) target = $region48
      $region47: #{tpu_custom_call.1} parent=5 // pred_region
        %s536 = ssub.s32 %s14, 2
        // Predicated region
        $region49: #{tpu_custom_call.1} parent=47 // pred_check
          %p537 = pneg %p132
        $region50: #{tpu_custom_call.1} parent=47 // pred_check_branch
          %539 = sbr.rel (%p537) target = $region52
        $region51: #{tpu_custom_call.1} parent=47 // pred_region
          %s540 = sand.u32 %s117, 1
          %s541 = scalar_lea.sflag [#allocation4], %s540
          %s542 = sand.u32 %s117, 1
          %s543 = smul.addr %s542, 8
          %s544 = scalar_lea.vmem [#allocation5], %s543
          %545 = dma.done %s541, 128
        $region52: #{tpu_custom_call.1} parent=47 // pred_fallthru
          _
      $region48: #{tpu_custom_call.1} parent=5 // pred_fallthru
        _
    $region6: #{tpu_custom_call.1} parent=1 // loop_footer
      %s18 = sadd.s32 1, %s14
    $region7: #{tpu_custom_call.1} parent=1 // loop_footer_branch
      %13 = sbr.rel target = $region3
    $region8: #{tpu_custom_call.1} parent=1 // loop_exit
      _
    %546 = vsyncpa [#allocation3], 1
    %s547 = scalar_lea.sflag [#allocation3], 1
    %548 = vsyncpa %s547, 1
    %549 = vsyncpa [#allocation4], 1
    %s550 = scalar_lea.sflag [#allocation4], 1
    %551 = vsyncpa %s550, 1

</llo_original>
